<compile_context>
chip_gen: v6e
topology: v6e:2x2x1
jax: 0.10.0
libtpu: 0.0.40
codegen_flags: <defaults>
</compile_context>

<pallas_src>
import jax
import jax.numpy as jnp
from jax.experimental import pallas as pl
from jax.experimental.pallas import tpu as pltpu


def _round_up(n, m):
    return ((n + m - 1) // m) * m


def mlp_kernel(x_ref, w1_ref, b1_ref, w2t_ref, b2_ref, o_ref):
    # In-kernel cast to bf16 (VPU, hidden under DMA), fc1 on the MXU with f32 accumulation.
    x = x_ref[...].astype(jnp.bfloat16)
    h = jnp.dot(x, w1_ref[...], preferred_element_type=jnp.float32)
    h = jnp.maximum(h + b1_ref[...], 0.0)          # bias + ReLU in f32 (VPU)
    # Dropout(0.6) -> identity at inference time.
    # TODO(synk): training-mode dropout (pltpu.prng_seed + prng_random_bits mask * 1/(1-p)).
    # fc3 as (8, H) @ (H, bm): contracts H, result is lane-dense; only row 0 of w2t is real.
    # h cast to bf16 so the per-step transpose / MXU pass moves half the data.
    z = jnp.einsum("oh,bh->ob", w2t_ref[...], h.astype(jnp.bfloat16),
                   preferred_element_type=jnp.float32)       # (8, bm)
    z = z[0:1, :] + b2_ref[0, 0]                             # (1, bm) + SMEM scalar
    o_ref[...] = jax.nn.sigmoid(z).astype(o_ref.dtype)


def anomaly_detection_forward(x, w1, b1, w2, b2, *, max_bm=4096):
    """x: (B, F) float32. w1: (F, H), b1: (1, H), w2: (H, 1), b2: (1, 1).

    Returns (B, 1) float32 = sigmoid(fc3(relu(fc1(x)))) (eval-mode dropout).
    """
    B, F = x.shape
    H = w1.shape[1]

    # Batch tile: as large as possible (amortize ~0.35 us/grid step), multiple of 128 so the
    # lane-dense (1, bm) output block satisfies the (8, 128) tiling constraint.
    bm = min(max_bm, _round_up(B, 128))
    # v7x megacore: keep at least 2 grid steps when there is enough batch to split,
    # otherwise one of the two TensorCores idles.
    if B >= 256:
        bm = min(bm, _round_up(pl.cdiv(B, 2), 128))
    # VMEM cap: double-buffered f32 x tile (2*4 B/elem) + in-kernel bf16 cast (2 B/elem)
    # kept under ~30 MiB so residents/temporaries fit the 40 MiB scoped limit on every gen.
    bytes_per_row = F * (2 * 4 + 2)
    bm_cap = max(128, ((30 * 1024 * 1024) // bytes_per_row) // 128 * 128)
    bm = min(bm, bm_cap)

    grid = pl.cdiv(B, bm)          # no padding of x: last block may read OOB garbage rows
    B_out = grid * bm              # output is evenly tiled; junk lanes sliced off below

    # W1 resident in bf16 (48 KiB at F=768); b1 in f32; W2^T padded to 8 sublanes in bf16.
    w1_bf16 = w1.astype(jnp.bfloat16)
    b1 = b1.reshape(1, H).astype(jnp.float32)
    w2t = jnp.zeros((8, H), jnp.bfloat16).at[0, :].set(w2.reshape(H).astype(jnp.bfloat16))
    b2 = b2.reshape(1, 1).astype(jnp.float32)

    out_row = pl.pallas_call(
        mlp_kernel,
        out_shape=jax.ShapeDtypeStruct((1, B_out), jnp.float32),
        grid=(grid,),
        in_specs=[
            pl.BlockSpec((bm, F), lambda i: (i, 0)),              # x tile (streamed, native dtype)
            pl.BlockSpec((F, H), lambda i: (0, 0)),               # W1 (resident, bf16)
            pl.BlockSpec((1, H), lambda i: (0, 0)),               # b1 (f32)
            pl.BlockSpec((8, H), lambda i: (0, 0)),               # W2^T padded (bf16)
            pl.BlockSpec(memory_space=pltpu.MemorySpace.SMEM),    # b2 scalar in SMEM
        ],
        out_specs=pl.BlockSpec((1, bm), lambda i: (0, i)),        # lane-dense output row
        compiler_params=pltpu.CompilerParams(
            dimension_semantics=("parallel",),    # v7x: shard batch tiles across 2 TCs
            vmem_limit_bytes=40 * 1024 * 1024,    # room for bm=4096 f32 stream + bf16 cast
        ),
    )(x, w1_bf16, b1, w2t, b2)

    return out_row[0, :B].reshape(B, 1)


def init_params(key, feature_dim=768, hidden=32):
    """Deterministic init mirroring nn.Linear default (uniform +/- 1/sqrt(fan_in)),
    stored transposed vs torch: W1 is (feature_dim, hidden), W2 is (hidden, 1)."""
    k1, k2, k3, k4 = jax.random.split(key, 4)
    bound1 = 1.0 / jnp.sqrt(feature_dim)
    bound2 = 1.0 / jnp.sqrt(hidden)
    w1 = jax.random.uniform(k1, (feature_dim, hidden), jnp.float32, -bound1, bound1)
    b1 = jax.random.uniform(k2, (1, hidden), jnp.float32, -bound1, bound1)
    w2 = jax.random.uniform(k3, (hidden, 1), jnp.float32, -bound2, bound2)
    b2 = jax.random.uniform(k4, (1, 1), jnp.float32, -bound2, bound2)
    return w1, b1, w2, b2


def _reference(x, w1, b1, w2, b2):
    # Mirrors the kernel's bf16 streaming / bf16 second projection with f32 accumulation.
    xb = x.astype(jnp.bfloat16).astype(jnp.float32)
    w1b = w1.astype(jnp.bfloat16).astype(jnp.float32)
    h = jnp.maximum(xb @ w1b + b1, 0.0)
    hb = h.astype(jnp.bfloat16).astype(jnp.float32)
    w2b = w2.astype(jnp.bfloat16).astype(jnp.float32)
    return jax.nn.sigmoid(hb @ w2b + b2)


if __name__ == "__main__":
    feature_dim = 768

    key = jax.random.PRNGKey(0)
    kx, kp, kx2 = jax.random.split(key, 3)
    w1, b1, w2, b2 = init_params(kp, feature_dim=feature_dim, hidden=32)

    # Small-batch run (single grid step, partial last block).
    batch = 8
    x = jax.random.normal(kx, (batch, feature_dim), dtype=jnp.float32)
    out = anomaly_detection_forward(x, w1, b1, w2, b2)
    out = jax.block_until_ready(out)
    ref = _reference(x, w1, b1, w2, b2)
    assert out.shape == (batch, 1)
    assert jnp.allclose(out, ref, atol=2e-3, rtol=2e-3)

    # Multi-step grid with an uneven (OOB) last block, exercising the no-pad path.
    batch2 = 300
    x2 = jax.random.normal(kx2, (batch2, feature_dim), dtype=jnp.float32)
    out2 = anomaly_detection_forward(x2, w1, b1, w2, b2)
    out2 = jax.block_until_ready(out2)
    ref2 = _reference(x2, w1, b1, w2, b2)
    assert out2.shape == (batch2, 1)
    assert jnp.allclose(out2, ref2, atol=2e-3, rtol=2e-3)
    assert jnp.all(jnp.isfinite(out2))

    print("KERNEL_OK")
</pallas_src>

<mosaic_0001>
module attributes {stable_mosaic.version = 11 : i64} {
  func.func @mlp_kernel(%arg0: i32, %arg1: memref<128x768xf32, #tpu.memory_space<vmem>>, %arg2: memref<768x32xbf16, #tpu.memory_space<vmem>>, %arg3: memref<1x32xf32, #tpu.memory_space<vmem>>, %arg4: memref<8x32xbf16, #tpu.memory_space<vmem>>, %arg5: memref<1x1xf32, #tpu.memory_space<smem>>, %arg6: memref<1x128xf32, #tpu.memory_space<vmem>>) attributes {dimension_semantics = [#tpu.dimension_semantics<parallel>], iteration_bounds = array<i64: 1>, scalar_prefetch = 0 : i64, scratch_operands = 0 : i64, tpu.core_type = #tpu.core_type<tc>, window_params = [{transform_indices = @transform_0, window_bounds = array<i64: 128, 768>}, {pipeline_mode = #tpu.pipeline_mode<synchronous>, transform_indices = @transform_1, window_bounds = array<i64: 768, 32>}, {pipeline_mode = #tpu.pipeline_mode<synchronous>, transform_indices = @transform_2, window_bounds = array<i64: 1, 32>}, {pipeline_mode = #tpu.pipeline_mode<synchronous>, transform_indices = @transform_3, window_bounds = array<i64: 8, 32>}, {transform_indices = @transform_4, window_bounds = array<i64: 1, 1>}, {transform_indices = @transform_5, window_bounds = array<i64: 1, 128>}]} {
    %c0 = arith.constant 0 : index
    %c0_0 = arith.constant 0 : index
    %0 = vector.load %arg1[%c0, %c0_0] : memref<128x768xf32, #tpu.memory_space<vmem>>, vector<128x768xf32>
    %1 = arith.truncf %0 : vector<128x768xf32> to vector<128x768xbf16>
    %c0_1 = arith.constant 0 : index
    %c0_2 = arith.constant 0 : index
    %2 = vector.load %arg2[%c0_1, %c0_2] : memref<768x32xbf16, #tpu.memory_space<vmem>>, vector<768x32xbf16>
    %cst = arith.constant dense<0.000000e+00> : vector<128x32xf32>
    %3 = tpu.matmul %1, %2, %cst {dimension_numbers = #tpu.dot_dimension_numbers<[1], [0], [0], [1], [0, 0, 1, 1], [], []>} : vector<128x768xbf16>, vector<768x32xbf16>, vector<128x32xf32> -> vector<128x32xf32>
    %c0_3 = arith.constant 0 : index
    %c0_4 = arith.constant 0 : index
    %4 = vector.load %arg3[%c0_3, %c0_4] : memref<1x32xf32, #tpu.memory_space<vmem>>, vector<1x32xf32>
    %5 = vector.broadcast %4 : vector<1x32xf32> to vector<128x32xf32>
    %6 = arith.addf %3, %5 : vector<128x32xf32>
    %cst_5 = arith.constant 0.000000e+00 : f32
    %7 = vector.broadcast %cst_5 : f32 to vector<128x32xf32>
    %8 = arith.maximumf %6, %7 : vector<128x32xf32>
    %c0_6 = arith.constant 0 : index
    %c0_7 = arith.constant 0 : index
    %9 = vector.load %arg4[%c0_6, %c0_7] : memref<8x32xbf16, #tpu.memory_space<vmem>>, vector<8x32xbf16>
    %10 = arith.truncf %8 : vector<128x32xf32> to vector<128x32xbf16>
    "tpu.trace_start"() <{level = 10 : i32, message = "oh,bh->ob"}> : () -> ()
    %cst_8 = arith.constant dense<0.000000e+00> : vector<8x128xf32>
    %11 = tpu.matmul %9, %10, %cst_8 {dimension_numbers = #tpu.dot_dimension_numbers<[1], [1], [0], [0], [0, 0, 1, 0], [], []>} : vector<8x32xbf16>, vector<128x32xbf16>, vector<8x128xf32> -> vector<8x128xf32>
    "tpu.trace_stop"() : () -> ()
    %12 = vector.extract_strided_slice %11 {offsets = [0, 0], sizes = [1, 128], strides = [1, 1]} : vector<8x128xf32> to vector<1x128xf32>
    %c0_9 = arith.constant 0 : index
    %c0_10 = arith.constant 0 : index
    %13 = memref.load %arg5[%c0_9, %c0_10] : memref<1x1xf32, #tpu.memory_space<smem>>
    %14 = vector.broadcast %13 : f32 to vector<1x128xf32>
    %15 = arith.addf %12, %14 : vector<1x128xf32>
    %16 = arith.negf %15 : vector<1x128xf32>
    %17 = math.exp %16 : vector<1x128xf32>
    %cst_11 = arith.constant 1.000000e+00 : f32
    %18 = vector.broadcast %cst_11 : f32 to vector<1x128xf32>
    %19 = arith.addf %18, %17 : vector<1x128xf32>
    %20 = arith.divf %18, %19 : vector<1x128xf32>
    %c0_12 = arith.constant 0 : index
    %c0_13 = arith.constant 0 : index
    %21 = vector.load %arg6[%c0_12, %c0_13] : memref<1x128xf32, #tpu.memory_space<vmem>>, vector<1x128xf32>
    tpu.vector_store %arg6[%c0_12, %c0_13], %20 {strides = array<i32>} : memref<1x128xf32, #tpu.memory_space<vmem>>, vector<1x128xf32>,
    return
  }
  func.func @transform_0(%arg0: i32) -> (i32, i32) {
    %c0_i32 = arith.constant 0 : i32
    %c0_i32_0 = arith.constant 0 : i32
    return %arg0, %c0_i32 : i32, i32
  }
  func.func @transform_1(%arg0: i32) -> (i32, i32) {
    %c0_i32 = arith.constant 0 : i32
    %c0_i32_0 = arith.constant 0 : i32
    %c0_i32_1 = arith.constant 0 : i32
    return %c0_i32, %c0_i32_0 : i32, i32
  }
  func.func @transform_2(%arg0: i32) -> (i32, i32) {
    %c0_i32 = arith.constant 0 : i32
    %c0_i32_0 = arith.constant 0 : i32
    %c0_i32_1 = arith.constant 0 : i32
    return %c0_i32, %c0_i32_0 : i32, i32
  }
  func.func @transform_3(%arg0: i32) -> (i32, i32) {
    %c0_i32 = arith.constant 0 : i32
    %c0_i32_0 = arith.constant 0 : i32
    %c0_i32_1 = arith.constant 0 : i32
    return %c0_i32, %c0_i32_0 : i32, i32
  }
  func.func @transform_4(%arg0: i32) -> (i32, i32) {
    %c0_i32 = arith.constant 0 : i32
    %c0_i32_0 = arith.constant 0 : i32
    %c0_i32_1 = arith.constant 0 : i32
    return %c0_i32, %c0_i32_0 : i32, i32
  }
  func.func @transform_5(%arg0: i32) -> (i32, i32) {
    %c0_i32 = arith.constant 0 : i32
    %c0_i32_0 = arith.constant 0 : i32
    return %c0_i32, %arg0 : i32, i32
  }
}

</mosaic_0001>

<llo_original>
// kernel: tpu_custom_call.1
$region0: #{tpu_custom_call.1}
  #allocation0 [shape = 'u32[]', space=smem, size = 0x4, offset = 0x4, fixed_abs, tag = 'smem constant byte address 0x4 - core index']
  #allocation1 [shape = 'u32[144,128]{1,0:T(1,128)}', space=vmem, size = 0x12000, scoped, tag = 'internal scratch']
  #allocation2 [shape = 'f32[1,1]{1,0:T(1,128)S(6)}', space=smem, size = 0x200, scoped, tag = 'scoped memory for tpu_custom_call.1']
  %s0 = inlined_call_operand.vmem [shape: f32[8,768], index: 0, kind: input, shape index: {}]
  %s1 = inlined_call_operand.vmem [shape: bf16[768,32], index: 1, kind: input, shape index: {}]
  %s2 = inlined_call_operand.vmem [shape: f32[1,32], index: 2, kind: input, shape index: {}]
  %s3 = inlined_call_operand.vmem [shape: bf16[8,32], index: 3, kind: input, shape index: {}]
  %s4 = inlined_call_operand.<no memory space> [shape: f32[1,1], index: 4, kind: input, shape index: {}]
  %s5 = inlined_call_operand.hbm [shape: f32[1,128], index: 5, kind: output, shape index: {}]
  %s6 = sld [smem:[#allocation0]]
  $region30: #{tpu_custom_call.1} parent=0
    _
  %s8 = ssub.s32 1, %s6
  %s9 = scalar_select 0, %s8, %s6
  %10 = sst [smem:[#allocation2]] %s4
  $region1: #{tpu_custom_call.1} parent=0
    #allocation3 [shape = 'u8[512]{0}', space=vmem, size = 0x400, scoped, tag = 'output window, operand 0, single buffered']
    #allocation4 [shape = 's32[1]{0}', space=sflag, size = 0x4, scoped, tag = 'scoped memory for tpu_custom_call.1']
    %11 = vsyncpa [#allocation4], 0
    // Predicated region
    $region2: #{tpu_custom_call.1} parent=1 // pred_check
      _
    $region3: #{tpu_custom_call.1} parent=1 // pred_check_branch
      %13 = sbr.rel (0) target = $region5
    $region4: #{tpu_custom_call.1} parent=1 // pred_region
      _
    $region5: #{tpu_custom_call.1} parent=1 // pred_fallthru
      _
    // Predicated region
    $region6: #{tpu_custom_call.1} parent=1 // pred_check
      _
    $region7: #{tpu_custom_call.1} parent=1 // pred_check_branch
      %15 = sbr.rel (0) target = $region9
    $region8: #{tpu_custom_call.1} parent=1 // pred_region
      _
    $region9: #{tpu_custom_call.1} parent=1 // pred_fallthru
      _
    // Predicated region
    $region10: #{tpu_custom_call.1} parent=1 // pred_check
      _
    $region11: #{tpu_custom_call.1} parent=1 // pred_check_branch
      %17 = sbr.rel (0) target = $region13
    $region12: #{tpu_custom_call.1} parent=1 // pred_region
      _
    $region13: #{tpu_custom_call.1} parent=1 // pred_fallthru
      _
    // Predicated region
    $region14: #{tpu_custom_call.1} parent=1 // pred_check
      _
    $region15: #{tpu_custom_call.1} parent=1 // pred_check_branch
      %19 = sbr.rel (0) target = $region17
    $region16: #{tpu_custom_call.1} parent=1 // pred_region
      _
    $region17: #{tpu_custom_call.1} parent=1 // pred_fallthru
      _
    // Predicated region
    $region18: #{tpu_custom_call.1} parent=1 // pred_check
      _
    $region19: #{tpu_custom_call.1} parent=1 // pred_check_branch
      %21 = sbr.rel (0) target = $region21
    $region20: #{tpu_custom_call.1} parent=1 // pred_region
      _
    $region21: #{tpu_custom_call.1} parent=1 // pred_fallthru
      _
    %v23 = vld [vmem:[%s0] sm:$0xff]
    %v24 = vld [vmem:[%s0 + $0x8] sm:$0xff]
    %v25 = vld [vmem:[%s0 + $0x10] sm:$0xff]
    %v26 = vld [vmem:[%s0 + $0x18] sm:$0xff]
    %v27 = vld [vmem:[%s0 + $0x20] sm:$0xff]
    %v28 = vld [vmem:[%s0 + $0x28] sm:$0xff]
    %v29 = vld [vmem:[%s0 + $0x30] sm:$0xff]
    %v30 = vld [vmem:[%s0 + $0x38] sm:$0xff]
    %v31 = vld [vmem:[%s0 + $0x40] sm:$0xff]
    %v32 = vld [vmem:[%s0 + $0x48] sm:$0xff]
    %v33 = vld [vmem:[%s0 + $0x50] sm:$0xff]
    %v34 = vld [vmem:[%s0 + $0x58] sm:$0xff]
    %v35 = vld [vmem:[%s0 + $0x60] sm:$0xff]
    %v36 = vld [vmem:[%s0 + $0x68] sm:$0xff]
    %v37 = vld [vmem:[%s0 + $0x70] sm:$0xff]
    %v38 = vld [vmem:[%s0 + $0x78] sm:$0xff]
    %v39 = vld [vmem:[%s0 + $0x80] sm:$0xff]
    %v40 = vld [vmem:[%s0 + $0x88] sm:$0xff]
    %v41 = vld [vmem:[%s0 + $0x90] sm:$0xff]
    %v42 = vld [vmem:[%s0 + $0x98] sm:$0xff]
    %v43 = vld [vmem:[%s0 + $0xa0] sm:$0xff]
    %v44 = vld [vmem:[%s0 + $0xa8] sm:$0xff]
    %v45 = vld [vmem:[%s0 + $0xb0] sm:$0xff]
    %v46 = vld [vmem:[%s0 + $0xb8] sm:$0xff]
    %v47 = vld [vmem:[%s0 + $0xc0] sm:$0xff]
    %v48 = vld [vmem:[%s0 + $0xc8] sm:$0xff]
    %v49 = vld [vmem:[%s0 + $0xd0] sm:$0xff]
    %v50 = vld [vmem:[%s0 + $0xd8] sm:$0xff]
    %v51 = vld [vmem:[%s0 + $0xe0] sm:$0xff]
    %v52 = vld [vmem:[%s0 + $0xe8] sm:$0xff]
    %v53 = vld [vmem:[%s0 + $0xf0] sm:$0xff]
    %v54 = vld [vmem:[%s0 + $0xf8] sm:$0xff]
    %v55 = vld [vmem:[%s0 + $0x100] sm:$0xff]
    %v56 = vld [vmem:[%s0 + $0x108] sm:$0xff]
    %v57 = vld [vmem:[%s0 + $0x110] sm:$0xff]
    %v58 = vld [vmem:[%s0 + $0x118] sm:$0xff]
    %v59 = vld [vmem:[%s0 + $0x120] sm:$0xff]
    %v60 = vld [vmem:[%s0 + $0x128] sm:$0xff]
    %v61 = vld [vmem:[%s0 + $0x130] sm:$0xff]
    %v62 = vld [vmem:[%s0 + $0x138] sm:$0xff]
    %v63 = vld [vmem:[%s0 + $0x140] sm:$0xff]
    %v64 = vld [vmem:[%s0 + $0x148] sm:$0xff]
    %v65 = vld [vmem:[%s0 + $0x150] sm:$0xff]
    %v66 = vld [vmem:[%s0 + $0x158] sm:$0xff]
    %v67 = vld [vmem:[%s0 + $0x160] sm:$0xff]
    %v68 = vld [vmem:[%s0 + $0x168] sm:$0xff]
    %v69 = vld [vmem:[%s0 + $0x170] sm:$0xff]
    %v70 = vld [vmem:[%s0 + $0x178] sm:$0xff]
    %v71 = vld [vmem:[%s0 + $0x180] sm:$0xff]
    %v72 = vld [vmem:[%s0 + $0x188] sm:$0xff]
    %v73 = vld [vmem:[%s0 + $0x190] sm:$0xff]
    %v74 = vld [vmem:[%s0 + $0x198] sm:$0xff]
    %v75 = vld [vmem:[%s0 + $0x1a0] sm:$0xff]
    %v76 = vld [vmem:[%s0 + $0x1a8] sm:$0xff]
    %v77 = vld [vmem:[%s0 + $0x1b0] sm:$0xff]
    %v78 = vld [vmem:[%s0 + $0x1b8] sm:$0xff]
    %v79 = vld [vmem:[%s0 + $0x1c0] sm:$0xff]
    %v80 = vld [vmem:[%s0 + $0x1c8] sm:$0xff]
    %v81 = vld [vmem:[%s0 + $0x1d0] sm:$0xff]
    %v82 = vld [vmem:[%s0 + $0x1d8] sm:$0xff]
    %v83 = vld [vmem:[%s0 + $0x1e0] sm:$0xff]
    %v84 = vld [vmem:[%s0 + $0x1e8] sm:$0xff]
    %v85 = vld [vmem:[%s0 + $0x1f0] sm:$0xff]
    %v86 = vld [vmem:[%s0 + $0x1f8] sm:$0xff]
    %v87 = vld [vmem:[%s0 + $0x200] sm:$0xff]
    %v88 = vld [vmem:[%s0 + $0x208] sm:$0xff]
    %v89 = vld [vmem:[%s0 + $0x210] sm:$0xff]
    %v90 = vld [vmem:[%s0 + $0x218] sm:$0xff]
    %v91 = vld [vmem:[%s0 + $0x220] sm:$0xff]
    %v92 = vld [vmem:[%s0 + $0x228] sm:$0xff]
    %v93 = vld [vmem:[%s0 + $0x230] sm:$0xff]
    %v94 = vld [vmem:[%s0 + $0x238] sm:$0xff]
    %v95 = vld [vmem:[%s0 + $0x240] sm:$0xff]
    %v96 = vld [vmem:[%s0 + $0x248] sm:$0xff]
    %v97 = vld [vmem:[%s0 + $0x250] sm:$0xff]
    %v98 = vld [vmem:[%s0 + $0x258] sm:$0xff]
    %v99 = vld [vmem:[%s0 + $0x260] sm:$0xff]
    %v100 = vld [vmem:[%s0 + $0x268] sm:$0xff]
    %v101 = vld [vmem:[%s0 + $0x270] sm:$0xff]
    %v102 = vld [vmem:[%s0 + $0x278] sm:$0xff]
    %v103 = vld [vmem:[%s0 + $0x280] sm:$0xff]
    %v104 = vld [vmem:[%s0 + $0x288] sm:$0xff]
    %v105 = vld [vmem:[%s0 + $0x290] sm:$0xff]
    %v106 = vld [vmem:[%s0 + $0x298] sm:$0xff]
    %v107 = vld [vmem:[%s0 + $0x2a0] sm:$0xff]
    %v108 = vld [vmem:[%s0 + $0x2a8] sm:$0xff]
    %v109 = vld [vmem:[%s0 + $0x2b0] sm:$0xff]
    %v110 = vld [vmem:[%s0 + $0x2b8] sm:$0xff]
    %v111 = vld [vmem:[%s0 + $0x2c0] sm:$0xff]
    %v112 = vld [vmem:[%s0 + $0x2c8] sm:$0xff]
    %v113 = vld [vmem:[%s0 + $0x2d0] sm:$0xff]
    %v114 = vld [vmem:[%s0 + $0x2d8] sm:$0xff]
    %v115 = vld [vmem:[%s0 + $0x2e0] sm:$0xff]
    %v116 = vld [vmem:[%s0 + $0x2e8] sm:$0xff]
    %v117 = vld [vmem:[%s0 + $0x2f0] sm:$0xff]
    %v118 = vld [vmem:[%s0 + $0x2f8] sm:$0xff]
    %v119 = vpack.c.bf16 %v29, %v23
    %v120 = vpack.c.bf16 %v30, %v24
    %v121 = vpack.c.bf16 %v31, %v25
    %v122 = vpack.c.bf16 %v32, %v26
    %v123 = vpack.c.bf16 %v33, %v27
    %v124 = vpack.c.bf16 %v34, %v28
    %v125 = vpack.c.bf16 %v41, %v35
    %v126 = vpack.c.bf16 %v42, %v36
    %v127 = vpack.c.bf16 %v43, %v37
    %v128 = vpack.c.bf16 %v44, %v38
    %v129 = vpack.c.bf16 %v45, %v39
    %v130 = vpack.c.bf16 %v46, %v40
    %v131 = vpack.c.bf16 %v53, %v47
    %v132 = vpack.c.bf16 %v54, %v48
    %v133 = vpack.c.bf16 %v55, %v49
    %v134 = vpack.c.bf16 %v56, %v50
    %v135 = vpack.c.bf16 %v57, %v51
    %v136 = vpack.c.bf16 %v58, %v52
    %v137 = vpack.c.bf16 %v65, %v59
    %v138 = vpack.c.bf16 %v66, %v60
    %v139 = vpack.c.bf16 %v67, %v61
    %v140 = vpack.c.bf16 %v68, %v62
    %v141 = vpack.c.bf16 %v69, %v63
    %v142 = vpack.c.bf16 %v70, %v64
    %v143 = vpack.c.bf16 %v77, %v71
    %v144 = vpack.c.bf16 %v78, %v72
    %v145 = vpack.c.bf16 %v79, %v73
    %v146 = vpack.c.bf16 %v80, %v74
    %v147 = vpack.c.bf16 %v81, %v75
    %v148 = vpack.c.bf16 %v82, %v76
    %v149 = vpack.c.bf16 %v89, %v83
    %v150 = vpack.c.bf16 %v90, %v84
    %v151 = vpack.c.bf16 %v91, %v85
    %v152 = vpack.c.bf16 %v92, %v86
    %v153 = vpack.c.bf16 %v93, %v87
    %v154 = vpack.c.bf16 %v94, %v88
    %v155 = vpack.c.bf16 %v101, %v95
    %v156 = vpack.c.bf16 %v102, %v96
    %v157 = vpack.c.bf16 %v103, %v97
    %v158 = vpack.c.bf16 %v104, %v98
    %v159 = vpack.c.bf16 %v105, %v99
    %v160 = vpack.c.bf16 %v106, %v100
    %v161 = vpack.c.bf16 %v113, %v107
    %v162 = vpack.c.bf16 %v114, %v108
    %v163 = vpack.c.bf16 %v115, %v109
    %v164 = vpack.c.bf16 %v116, %v110
    %v165 = vpack.c.bf16 %v117, %v111
    %v166 = vpack.c.bf16 %v118, %v112
    %v167 = vld [vmem:[%s1] sm:$0xf]
    %v168 = vld [vmem:[%s1 + $0x4] sm:$0xf]
    %v169 = vld [vmem:[%s1 + $0x8] sm:$0xf]
    %v170 = vld [vmem:[%s1 + $0xc] sm:$0xf]
    %v171 = vld [vmem:[%s1 + $0x10] sm:$0xf]
    %v172 = vld [vmem:[%s1 + $0x14] sm:$0xf]
    %v173 = vld [vmem:[%s1 + $0x18] sm:$0xf]
    %v174 = vld [vmem:[%s1 + $0x1c] sm:$0xf]
    %v175 = vld [vmem:[%s1 + $0x20] sm:$0xf]
    %v176 = vld [vmem:[%s1 + $0x24] sm:$0xf]
    %v177 = vld [vmem:[%s1 + $0x28] sm:$0xf]
    %v178 = vld [vmem:[%s1 + $0x2c] sm:$0xf]
    %v179 = vld [vmem:[%s1 + $0x30] sm:$0xf]
    %v180 = vld [vmem:[%s1 + $0x34] sm:$0xf]
    %v181 = vld [vmem:[%s1 + $0x38] sm:$0xf]
    %v182 = vld [vmem:[%s1 + $0x3c] sm:$0xf]
    %v183 = vld [vmem:[%s1 + $0x40] sm:$0xf]
    %v184 = vld [vmem:[%s1 + $0x44] sm:$0xf]
    %v185 = vld [vmem:[%s1 + $0x48] sm:$0xf]
    %v186 = vld [vmem:[%s1 + $0x4c] sm:$0xf]
    %v187 = vld [vmem:[%s1 + $0x50] sm:$0xf]
    %v188 = vld [vmem:[%s1 + $0x54] sm:$0xf]
    %v189 = vld [vmem:[%s1 + $0x58] sm:$0xf]
    %v190 = vld [vmem:[%s1 + $0x5c] sm:$0xf]
    %v191 = vld [vmem:[%s1 + $0x60] sm:$0xf]
    %v192 = vld [vmem:[%s1 + $0x64] sm:$0xf]
    %v193 = vld [vmem:[%s1 + $0x68] sm:$0xf]
    %v194 = vld [vmem:[%s1 + $0x6c] sm:$0xf]
    %v195 = vld [vmem:[%s1 + $0x70] sm:$0xf]
    %v196 = vld [vmem:[%s1 + $0x74] sm:$0xf]
    %v197 = vld [vmem:[%s1 + $0x78] sm:$0xf]
    %v198 = vld [vmem:[%s1 + $0x7c] sm:$0xf]
    %v199 = vld [vmem:[%s1 + $0x80] sm:$0xf]
    %v200 = vld [vmem:[%s1 + $0x84] sm:$0xf]
    %v201 = vld [vmem:[%s1 + $0x88] sm:$0xf]
    %v202 = vld [vmem:[%s1 + $0x8c] sm:$0xf]
    %v203 = vld [vmem:[%s1 + $0x90] sm:$0xf]
    %v204 = vld [vmem:[%s1 + $0x94] sm:$0xf]
    %v205 = vld [vmem:[%s1 + $0x98] sm:$0xf]
    %v206 = vld [vmem:[%s1 + $0x9c] sm:$0xf]
    %v207 = vld [vmem:[%s1 + $0xa0] sm:$0xf]
    %v208 = vld [vmem:[%s1 + $0xa4] sm:$0xf]
    %v209 = vld [vmem:[%s1 + $0xa8] sm:$0xf]
    %v210 = vld [vmem:[%s1 + $0xac] sm:$0xf]
    %v211 = vld [vmem:[%s1 + $0xb0] sm:$0xf]
    %v212 = vld [vmem:[%s1 + $0xb4] sm:$0xf]
    %v213 = vld [vmem:[%s1 + $0xb8] sm:$0xf]
    %v214 = vld [vmem:[%s1 + $0xbc] sm:$0xf]
    %v215 = vld [vmem:[%s1 + $0xc0] sm:$0xf]
    %v216 = vld [vmem:[%s1 + $0xc4] sm:$0xf]
    %v217 = vld [vmem:[%s1 + $0xc8] sm:$0xf]
    %v218 = vld [vmem:[%s1 + $0xcc] sm:$0xf]
    %v219 = vld [vmem:[%s1 + $0xd0] sm:$0xf]
    %v220 = vld [vmem:[%s1 + $0xd4] sm:$0xf]
    %v221 = vld [vmem:[%s1 + $0xd8] sm:$0xf]
    %v222 = vld [vmem:[%s1 + $0xdc] sm:$0xf]
    %v223 = vld [vmem:[%s1 + $0xe0] sm:$0xf]
    %v224 = vld [vmem:[%s1 + $0xe4] sm:$0xf]
    %v225 = vld [vmem:[%s1 + $0xe8] sm:$0xf]
    %v226 = vld [vmem:[%s1 + $0xec] sm:$0xf]
    %v227 = vld [vmem:[%s1 + $0xf0] sm:$0xf]
    %v228 = vld [vmem:[%s1 + $0xf4] sm:$0xf]
    %v229 = vld [vmem:[%s1 + $0xf8] sm:$0xf]
    %v230 = vld [vmem:[%s1 + $0xfc] sm:$0xf]
    %v231 = vld [vmem:[%s1 + $0x100] sm:$0xf]
    %v232 = vld [vmem:[%s1 + $0x104] sm:$0xf]
    %v233 = vld [vmem:[%s1 + $0x108] sm:$0xf]
    %v234 = vld [vmem:[%s1 + $0x10c] sm:$0xf]
    %v235 = vld [vmem:[%s1 + $0x110] sm:$0xf]
    %v236 = vld [vmem:[%s1 + $0x114] sm:$0xf]
    %v237 = vld [vmem:[%s1 + $0x118] sm:$0xf]
    %v238 = vld [vmem:[%s1 + $0x11c] sm:$0xf]
    %v239 = vld [vmem:[%s1 + $0x120] sm:$0xf]
    %v240 = vld [vmem:[%s1 + $0x124] sm:$0xf]
    %v241 = vld [vmem:[%s1 + $0x128] sm:$0xf]
    %v242 = vld [vmem:[%s1 + $0x12c] sm:$0xf]
    %v243 = vld [vmem:[%s1 + $0x130] sm:$0xf]
    %v244 = vld [vmem:[%s1 + $0x134] sm:$0xf]
    %v245 = vld [vmem:[%s1 + $0x138] sm:$0xf]
    %v246 = vld [vmem:[%s1 + $0x13c] sm:$0xf]
    %v247 = vld [vmem:[%s1 + $0x140] sm:$0xf]
    %v248 = vld [vmem:[%s1 + $0x144] sm:$0xf]
    %v249 = vld [vmem:[%s1 + $0x148] sm:$0xf]
    %v250 = vld [vmem:[%s1 + $0x14c] sm:$0xf]
    %v251 = vld [vmem:[%s1 + $0x150] sm:$0xf]
    %v252 = vld [vmem:[%s1 + $0x154] sm:$0xf]
    %v253 = vld [vmem:[%s1 + $0x158] sm:$0xf]
    %v254 = vld [vmem:[%s1 + $0x15c] sm:$0xf]
    %v255 = vld [vmem:[%s1 + $0x160] sm:$0xf]
    %v256 = vld [vmem:[%s1 + $0x164] sm:$0xf]
    %v257 = vld [vmem:[%s1 + $0x168] sm:$0xf]
    %v258 = vld [vmem:[%s1 + $0x16c] sm:$0xf]
    %v259 = vld [vmem:[%s1 + $0x170] sm:$0xf]
    %v260 = vld [vmem:[%s1 + $0x174] sm:$0xf]
    %v261 = vld [vmem:[%s1 + $0x178] sm:$0xf]
    %v262 = vld [vmem:[%s1 + $0x17c] sm:$0xf]
    %v263 = vld [vmem:[%s2] sm:$0x1]
    %v265 = vlaneseq
    %v266 = vshrl.u32 %v265, 7
    %v267 = vsub.s32 0, %v266
    %v268 = vrot.slane %v263, %v267
    %v366 = vunpack.c.l.b16 %v167
    %v367 = vunpack.c.l.b16 %v168
    %v368 = vunpack.c.l.b16 %v169
    %v369 = vunpack.c.l.b16 %v170
    %v370 = vunpack.c.l.b16 %v171
    %v371 = vunpack.c.l.b16 %v172
    %v372 = vunpack.c.l.b16 %v173
    %v373 = vunpack.c.l.b16 %v174
    %v374 = vunpack.c.l.b16 %v175
    %v375 = vunpack.c.l.b16 %v176
    %v376 = vunpack.c.l.b16 %v177
    %v377 = vunpack.c.l.b16 %v178
    %v378 = vunpack.c.l.b16 %v179
    %v379 = vunpack.c.l.b16 %v180
    %v380 = vunpack.c.l.b16 %v181
    %v381 = vunpack.c.l.b16 %v182
    %v382 = vunpack.c.l.b16 %v183
    %v383 = vunpack.c.l.b16 %v184
    %v384 = vunpack.c.l.b16 %v185
    %v385 = vunpack.c.l.b16 %v186
    %v386 = vunpack.c.l.b16 %v187
    %v387 = vunpack.c.l.b16 %v188
    %v388 = vunpack.c.l.b16 %v189
    %v389 = vunpack.c.l.b16 %v190
    %v390 = vunpack.c.l.b16 %v191
    %v391 = vunpack.c.l.b16 %v192
    %v392 = vunpack.c.l.b16 %v193
    %v393 = vunpack.c.l.b16 %v194
    %v394 = vunpack.c.l.b16 %v195
    %v395 = vunpack.c.l.b16 %v196
    %v396 = vunpack.c.l.b16 %v197
    %v397 = vunpack.c.l.b16 %v198
    %v398 = vunpack.c.l.b16 %v199
    %v399 = vunpack.c.l.b16 %v200
    %v400 = vunpack.c.l.b16 %v201
    %v401 = vunpack.c.l.b16 %v202
    %v402 = vunpack.c.l.b16 %v203
    %v403 = vunpack.c.l.b16 %v204
    %v404 = vunpack.c.l.b16 %v205
    %v405 = vunpack.c.l.b16 %v206
    %v406 = vunpack.c.l.b16 %v207
    %v407 = vunpack.c.l.b16 %v208
    %v408 = vunpack.c.l.b16 %v209
    %v409 = vunpack.c.l.b16 %v210
    %v410 = vunpack.c.l.b16 %v211
    %v411 = vunpack.c.l.b16 %v212
    %v412 = vunpack.c.l.b16 %v213
    %v413 = vunpack.c.l.b16 %v214
    %v414 = vunpack.c.l.b16 %v215
    %v415 = vunpack.c.l.b16 %v216
    %v416 = vunpack.c.l.b16 %v217
    %v417 = vunpack.c.l.b16 %v218
    %v418 = vunpack.c.l.b16 %v219
    %v419 = vunpack.c.l.b16 %v220
    %v420 = vunpack.c.l.b16 %v221
    %v421 = vunpack.c.l.b16 %v222
    %v422 = vunpack.c.l.b16 %v223
    %v423 = vunpack.c.l.b16 %v224
    %v424 = vunpack.c.l.b16 %v225
    %v425 = vunpack.c.l.b16 %v226
    %v426 = vunpack.c.l.b16 %v227
    %v427 = vunpack.c.l.b16 %v228
    %v428 = vunpack.c.l.b16 %v229
    %v429 = vunpack.c.l.b16 %v230
    %v430 = vunpack.c.l.b16 %v231
    %v431 = vunpack.c.l.b16 %v232
    %v432 = vunpack.c.l.b16 %v233
    %v433 = vunpack.c.l.b16 %v234
    %v434 = vunpack.c.l.b16 %v235
    %v435 = vunpack.c.l.b16 %v236
    %v436 = vunpack.c.l.b16 %v237
    %v437 = vunpack.c.l.b16 %v238
    %v438 = vunpack.c.l.b16 %v239
    %v439 = vunpack.c.l.b16 %v240
    %v440 = vunpack.c.l.b16 %v241
    %v441 = vunpack.c.l.b16 %v242
    %v442 = vunpack.c.l.b16 %v243
    %v443 = vunpack.c.l.b16 %v244
    %v444 = vunpack.c.l.b16 %v245
    %v445 = vunpack.c.l.b16 %v246
    %v446 = vunpack.c.l.b16 %v247
    %v447 = vunpack.c.l.b16 %v248
    %v448 = vunpack.c.l.b16 %v249
    %v449 = vunpack.c.l.b16 %v250
    %v450 = vunpack.c.l.b16 %v251
    %v451 = vunpack.c.l.b16 %v252
    %v452 = vunpack.c.l.b16 %v253
    %v453 = vunpack.c.l.b16 %v254
    %v454 = vunpack.c.l.b16 %v255
    %v455 = vunpack.c.l.b16 %v256
    %v456 = vunpack.c.l.b16 %v257
    %v457 = vunpack.c.l.b16 %v258
    %v458 = vunpack.c.l.b16 %v259
    %v459 = vunpack.c.l.b16 %v260
    %v460 = vunpack.c.l.b16 %v261
    %v461 = vunpack.c.l.b16 %v262
    %v462 = vpack.c.b16 %v367, %v366
    %v463 = vpack.c.b16 %v369, %v368
    %v464 = vpack.c.b16 %v371, %v370
    %v465 = vpack.c.b16 %v373, %v372
    %v466 = vpack.c.b16 %v375, %v374
    %v467 = vpack.c.b16 %v377, %v376
    %v468 = vpack.c.b16 %v379, %v378
    %v469 = vpack.c.b16 %v381, %v380
    %v470 = vpack.c.b16 %v383, %v382
    %v471 = vpack.c.b16 %v385, %v384
    %v472 = vpack.c.b16 %v387, %v386
    %v473 = vpack.c.b16 %v389, %v388
    %v474 = vpack.c.b16 %v391, %v390
    %v475 = vpack.c.b16 %v393, %v392
    %v476 = vpack.c.b16 %v395, %v394
    %v477 = vpack.c.b16 %v397, %v396
    %v478 = vpack.c.b16 %v399, %v398
    %v479 = vpack.c.b16 %v401, %v400
    %v480 = vpack.c.b16 %v403, %v402
    %v481 = vpack.c.b16 %v405, %v404
    %v482 = vpack.c.b16 %v407, %v406
    %v483 = vpack.c.b16 %v409, %v408
    %v484 = vpack.c.b16 %v411, %v410
    %v485 = vpack.c.b16 %v413, %v412
    %v486 = vpack.c.b16 %v415, %v414
    %v487 = vpack.c.b16 %v417, %v416
    %v488 = vpack.c.b16 %v419, %v418
    %v489 = vpack.c.b16 %v421, %v420
    %v490 = vpack.c.b16 %v423, %v422
    %v491 = vpack.c.b16 %v425, %v424
    %v492 = vpack.c.b16 %v427, %v426
    %v493 = vpack.c.b16 %v429, %v428
    %v494 = vpack.c.b16 %v431, %v430
    %v495 = vpack.c.b16 %v433, %v432
    %v496 = vpack.c.b16 %v435, %v434
    %v497 = vpack.c.b16 %v437, %v436
    %v498 = vpack.c.b16 %v439, %v438
    %v499 = vpack.c.b16 %v441, %v440
    %v500 = vpack.c.b16 %v443, %v442
    %v501 = vpack.c.b16 %v445, %v444
    %v502 = vpack.c.b16 %v447, %v446
    %v503 = vpack.c.b16 %v449, %v448
    %v504 = vpack.c.b16 %v451, %v450
    %v505 = vpack.c.b16 %v453, %v452
    %v506 = vpack.c.b16 %v455, %v454
    %v507 = vpack.c.b16 %v457, %v456
    %v508 = vpack.c.b16 %v459, %v458
    %v509 = vpack.c.b16 %v461, %v460
    %558 = vmatprep.subr.bf16.mxu0 0
    %559 = vmatpush1.bf16.msra.mxu0 %v469
    %560 = vmatprep.subr.bf16.mxu0 0
    %561 = vmatpush1.bf16.msra.mxu0 %v468
    %562 = vmatprep.subr.bf16.mxu0 0
    %563 = vmatpush1.bf16.msra.mxu0 %v467
    %564 = vmatprep.subr.bf16.mxu0 0
    %565 = vmatpush1.bf16.msra.mxu0 %v466
    %566 = vmatprep.subr.bf16.mxu0 0
    %567 = vmatpush1.bf16.msra.mxu0 %v465
    %568 = vmatprep.subr.bf16.mxu0 0
    %569 = vmatpush1.bf16.msra.mxu0 %v464
    %570 = vmatprep.subr.bf16.mxu0 0
    %571 = vmatpush1.bf16.msra.mxu0 %v463
    %572 = vmatprep.subr.bf16.mxu0 0
    %573 = vmatpush1.bf16.msra.mxu0 %v462
    %574 = vmatprep.subr.bf16.mxu0 0
    %575 = vmatpush2.bf16.msra.mxu0 %v477
    %576 = vmatprep.subr.bf16.mxu0 0
    %577 = vmatpush2.bf16.msra.mxu0 %v476
    %578 = vmatprep.subr.bf16.mxu0 0
    %579 = vmatpush2.bf16.msra.mxu0 %v475
    %580 = vmatprep.subr.bf16.mxu0 0
    %581 = vmatpush2.bf16.msra.mxu0 %v474
    %582 = vmatprep.subr.bf16.mxu0 0
    %583 = vmatpush2.bf16.msra.mxu0 %v473
    %584 = vmatprep.subr.bf16.mxu0 0
    %585 = vmatpush2.bf16.msra.mxu0 %v472
    %586 = vmatprep.subr.bf16.mxu0 0
    %587 = vmatpush2.bf16.msra.mxu0 %v471
    %588 = vmatprep.subr.bf16.mxu0 0
    %589 = vmatpush2.bf16.msra.mxu0 %v470
    %590 = vmatprep.mubr.bf16.mxu0 %v120
    %591 = vmatmul.mubr.bf16.gmra.mxu0 %v119
    %v592 = vpop.f32.mrf.mxu0
    %v593 = vadd.f32 %v268, %v592
    %v594 = vpop.f32.mrf.mxu0
    %v595 = vpop.f32.mrf.mxu0
    %v596 = vadd.f32 %v268, %v595
    %v597 = vpop.f32.mrf.mxu0
    %598 = vmatprep.mubr.bf16.mxu0 %v126
    %599 = vmatmul.mubr.bf16.gmra.mxu0 %v125
    %v600 = vpop.f32.mrf.mxu0
    %v601 = vadd.f32 %v268, %v600
    %v602 = vpop.f32.mrf.mxu0
    %v603 = vpop.f32.mrf.mxu0
    %v604 = vadd.f32 %v268, %v603
    %v605 = vpop.f32.mrf.mxu0
    %606 = vmatprep.mubr.bf16.mxu0 %v132
    %607 = vmatmul.mubr.bf16.gmra.mxu0 %v131
    %v608 = vpop.f32.mrf.mxu0
    %v609 = vadd.f32 %v268, %v608
    %v610 = vpop.f32.mrf.mxu0
    %v611 = vpop.f32.mrf.mxu0
    %v612 = vadd.f32 %v268, %v611
    %v613 = vpop.f32.mrf.mxu0
    %614 = vmatprep.mubr.bf16.mxu0 %v138
    %615 = vmatmul.mubr.bf16.gmra.mxu0 %v137
    %v616 = vpop.f32.mrf.mxu0
    %v617 = vadd.f32 %v268, %v616
    %v618 = vpop.f32.mrf.mxu0
    %v619 = vpop.f32.mrf.mxu0
    %v620 = vadd.f32 %v268, %v619
    %v621 = vpop.f32.mrf.mxu0
    %622 = vmatprep.mubr.bf16.mxu0 %v144
    %623 = vmatmul.mubr.bf16.gmra.mxu0 %v143
    %v624 = vpop.f32.mrf.mxu0
    %v625 = vadd.f32 %v268, %v624
    %v626 = vpop.f32.mrf.mxu0
    %v627 = vpop.f32.mrf.mxu0
    %v628 = vadd.f32 %v268, %v627
    %v629 = vpop.f32.mrf.mxu0
    %630 = vmatprep.mubr.bf16.mxu0 %v150
    %631 = vmatmul.mubr.bf16.gmra.mxu0 %v149
    %v632 = vpop.f32.mrf.mxu0
    %v633 = vadd.f32 %v268, %v632
    %v634 = vpop.f32.mrf.mxu0
    %v635 = vpop.f32.mrf.mxu0
    %v636 = vadd.f32 %v268, %v635
    %v637 = vpop.f32.mrf.mxu0
    %638 = vmatprep.mubr.bf16.mxu0 %v156
    %639 = vmatmul.mubr.bf16.gmra.mxu0 %v155
    %v640 = vpop.f32.mrf.mxu0
    %v641 = vadd.f32 %v268, %v640
    %v642 = vpop.f32.mrf.mxu0
    %v643 = vpop.f32.mrf.mxu0
    %v644 = vadd.f32 %v268, %v643
    %v645 = vpop.f32.mrf.mxu0
    %646 = vmatprep.mubr.bf16.mxu0 %v162
    %647 = vmatmul.mubr.bf16.gmra.mxu0 %v161
    %v648 = vpop.f32.mrf.mxu0
    %v649 = vadd.f32 %v268, %v648
    %v650 = vpop.f32.mrf.mxu0
    %v651 = vpop.f32.mrf.mxu0
    %v652 = vadd.f32 %v268, %v651
    %v653 = vpop.f32.mrf.mxu0
    %654 = vdwg.mxu0
    %655 = vmatprep.subr.bf16.mxu0 0
    %656 = vmatpush1.bf16.msra.mxu0 %v485
    %657 = vmatprep.subr.bf16.mxu0 0
    %658 = vmatpush1.bf16.msra.mxu0 %v484
    %659 = vmatprep.subr.bf16.mxu0 0
    %660 = vmatpush1.bf16.msra.mxu0 %v483
    %661 = vmatprep.subr.bf16.mxu0 0
    %662 = vmatpush1.bf16.msra.mxu0 %v482
    %663 = vmatprep.subr.bf16.mxu0 0
    %664 = vmatpush1.bf16.msra.mxu0 %v481
    %665 = vmatprep.subr.bf16.mxu0 0
    %666 = vmatpush1.bf16.msra.mxu0 %v480
    %667 = vmatprep.subr.bf16.mxu0 0
    %668 = vmatpush1.bf16.msra.mxu0 %v479
    %669 = vmatprep.subr.bf16.mxu0 0
    %670 = vmatpush1.bf16.msra.mxu0 %v478
    %671 = vmatprep.subr.bf16.mxu0 0
    %672 = vmatpush2.bf16.msra.mxu0 %v493
    %673 = vmatprep.subr.bf16.mxu0 0
    %674 = vmatpush2.bf16.msra.mxu0 %v492
    %675 = vmatprep.subr.bf16.mxu0 0
    %676 = vmatpush2.bf16.msra.mxu0 %v491
    %677 = vmatprep.subr.bf16.mxu0 0
    %678 = vmatpush2.bf16.msra.mxu0 %v490
    %679 = vmatprep.subr.bf16.mxu0 0
    %680 = vmatpush2.bf16.msra.mxu0 %v489
    %681 = vmatprep.subr.bf16.mxu0 0
    %682 = vmatpush2.bf16.msra.mxu0 %v488
    %683 = vmatprep.subr.bf16.mxu0 0
    %684 = vmatpush2.bf16.msra.mxu0 %v487
    %685 = vmatprep.subr.bf16.mxu0 0
    %686 = vmatpush2.bf16.msra.mxu0 %v486
    %687 = vmatprep.mubr.bf16.mxu0 %v122
    %688 = vmatmul.mubr.bf16.gmra.mxu0 %v121
    %v689 = vpop.f32.mrf.mxu0
    %v690 = vadd.f32 %v593, %v689
    %v691 = vpop.f32.mrf.mxu0
    %v692 = vpop.f32.mrf.mxu0
    %v693 = vadd.f32 %v596, %v692
    %v694 = vpop.f32.mrf.mxu0
    %695 = vmatprep.mubr.bf16.mxu0 %v128
    %696 = vmatmul.mubr.bf16.gmra.mxu0 %v127
    %v697 = vpop.f32.mrf.mxu0
    %v698 = vadd.f32 %v601, %v697
    %v699 = vpop.f32.mrf.mxu0
    %v700 = vpop.f32.mrf.mxu0
    %v701 = vadd.f32 %v604, %v700
    %v702 = vpop.f32.mrf.mxu0
    %703 = vmatprep.mubr.bf16.mxu0 %v134
    %704 = vmatmul.mubr.bf16.gmra.mxu0 %v133
    %v705 = vpop.f32.mrf.mxu0
    %v706 = vadd.f32 %v609, %v705
    %v707 = vpop.f32.mrf.mxu0
    %v708 = vpop.f32.mrf.mxu0
    %v709 = vadd.f32 %v612, %v708
    %v710 = vpop.f32.mrf.mxu0
    %711 = vmatprep.mubr.bf16.mxu0 %v140
    %712 = vmatmul.mubr.bf16.gmra.mxu0 %v139
    %v713 = vpop.f32.mrf.mxu0
    %v714 = vadd.f32 %v617, %v713
    %v715 = vpop.f32.mrf.mxu0
    %v716 = vpop.f32.mrf.mxu0
    %v717 = vadd.f32 %v620, %v716
    %v718 = vpop.f32.mrf.mxu0
    %719 = vmatprep.mubr.bf16.mxu0 %v146
    %720 = vmatmul.mubr.bf16.gmra.mxu0 %v145
    %v721 = vpop.f32.mrf.mxu0
    %v722 = vadd.f32 %v625, %v721
    %v723 = vpop.f32.mrf.mxu0
    %v724 = vpop.f32.mrf.mxu0
    %v725 = vadd.f32 %v628, %v724
    %v726 = vpop.f32.mrf.mxu0
    %727 = vmatprep.mubr.bf16.mxu0 %v152
    %728 = vmatmul.mubr.bf16.gmra.mxu0 %v151
    %v729 = vpop.f32.mrf.mxu0
    %v730 = vadd.f32 %v633, %v729
    %v731 = vpop.f32.mrf.mxu0
    %v732 = vpop.f32.mrf.mxu0
    %v733 = vadd.f32 %v636, %v732
    %v734 = vpop.f32.mrf.mxu0
    %735 = vmatprep.mubr.bf16.mxu0 %v158
    %736 = vmatmul.mubr.bf16.gmra.mxu0 %v157
    %v737 = vpop.f32.mrf.mxu0
    %v738 = vadd.f32 %v641, %v737
    %v739 = vpop.f32.mrf.mxu0
    %v740 = vpop.f32.mrf.mxu0
    %v741 = vadd.f32 %v644, %v740
    %v742 = vpop.f32.mrf.mxu0
    %743 = vmatprep.mubr.bf16.mxu0 %v164
    %744 = vmatmul.mubr.bf16.gmra.mxu0 %v163
    %v745 = vpop.f32.mrf.mxu0
    %v746 = vadd.f32 %v649, %v745
    %v747 = vpop.f32.mrf.mxu0
    %v748 = vpop.f32.mrf.mxu0
    %v749 = vadd.f32 %v652, %v748
    %v750 = vpop.f32.mrf.mxu0
    %751 = vdwg.mxu0
    %752 = vmatprep.subr.bf16.mxu0 0
    %753 = vmatpush1.bf16.msra.mxu0 %v501
    %754 = vmatprep.subr.bf16.mxu0 0
    %755 = vmatpush1.bf16.msra.mxu0 %v500
    %756 = vmatprep.subr.bf16.mxu0 0
    %757 = vmatpush1.bf16.msra.mxu0 %v499
    %758 = vmatprep.subr.bf16.mxu0 0
    %759 = vmatpush1.bf16.msra.mxu0 %v498
    %760 = vmatprep.subr.bf16.mxu0 0
    %761 = vmatpush1.bf16.msra.mxu0 %v497
    %762 = vmatprep.subr.bf16.mxu0 0
    %763 = vmatpush1.bf16.msra.mxu0 %v496
    %764 = vmatprep.subr.bf16.mxu0 0
    %765 = vmatpush1.bf16.msra.mxu0 %v495
    %766 = vmatprep.subr.bf16.mxu0 0
    %767 = vmatpush1.bf16.msra.mxu0 %v494
    %768 = vmatprep.subr.bf16.mxu0 0
    %769 = vmatpush2.bf16.msra.mxu0 %v509
    %770 = vmatprep.subr.bf16.mxu0 0
    %771 = vmatpush2.bf16.msra.mxu0 %v508
    %772 = vmatprep.subr.bf16.mxu0 0
    %773 = vmatpush2.bf16.msra.mxu0 %v507
    %774 = vmatprep.subr.bf16.mxu0 0
    %775 = vmatpush2.bf16.msra.mxu0 %v506
    %776 = vmatprep.subr.bf16.mxu0 0
    %777 = vmatpush2.bf16.msra.mxu0 %v505
    %778 = vmatprep.subr.bf16.mxu0 0
    %779 = vmatpush2.bf16.msra.mxu0 %v504
    %780 = vmatprep.subr.bf16.mxu0 0
    %781 = vmatpush2.bf16.msra.mxu0 %v503
    %782 = vmatprep.subr.bf16.mxu0 0
    %783 = vmatpush2.bf16.msra.mxu0 %v502
    %784 = vmatprep.mubr.bf16.mxu0 %v124
    %785 = vmatmul.mubr.bf16.gmra.mxu0 %v123
    %v786 = vpop.f32.mrf.mxu0
    %v787 = vadd.f32 %v690, %v786
    %v788 = vpop.f32.mrf.mxu0
    %v789 = vpop.f32.mrf.mxu0
    %v790 = vadd.f32 %v693, %v789
    %v791 = vpop.f32.mrf.mxu0
    %792 = vmatprep.mubr.bf16.mxu0 %v130
    %793 = vmatmul.mubr.bf16.gmra.mxu0 %v129
    %v794 = vpop.f32.mrf.mxu0
    %v795 = vadd.f32 %v698, %v794
    %v796 = vpop.f32.mrf.mxu0
    %v797 = vpop.f32.mrf.mxu0
    %v798 = vadd.f32 %v701, %v797
    %v799 = vpop.f32.mrf.mxu0
    %800 = vmatprep.mubr.bf16.mxu0 %v136
    %801 = vmatmul.mubr.bf16.gmra.mxu0 %v135
    %v802 = vpop.f32.mrf.mxu0
    %v803 = vadd.f32 %v706, %v802
    %v804 = vpop.f32.mrf.mxu0
    %v805 = vpop.f32.mrf.mxu0
    %v806 = vadd.f32 %v709, %v805
    %v807 = vpop.f32.mrf.mxu0
    %808 = vmatprep.mubr.bf16.mxu0 %v142
    %809 = vmatmul.mubr.bf16.gmra.mxu0 %v141
    %v810 = vpop.f32.mrf.mxu0
    %v811 = vadd.f32 %v714, %v810
    %v812 = vpop.f32.mrf.mxu0
    %v813 = vpop.f32.mrf.mxu0
    %v814 = vadd.f32 %v717, %v813
    %v815 = vpop.f32.mrf.mxu0
    %816 = vmatprep.mubr.bf16.mxu0 %v148
    %817 = vmatmul.mubr.bf16.gmra.mxu0 %v147
    %v818 = vpop.f32.mrf.mxu0
    %v819 = vadd.f32 %v722, %v818
    %v820 = vpop.f32.mrf.mxu0
    %v821 = vpop.f32.mrf.mxu0
    %v822 = vadd.f32 %v725, %v821
    %v823 = vpop.f32.mrf.mxu0
    %824 = vmatprep.mubr.bf16.mxu0 %v154
    %825 = vmatmul.mubr.bf16.gmra.mxu0 %v153
    %v826 = vpop.f32.mrf.mxu0
    %v827 = vadd.f32 %v730, %v826
    %v828 = vpop.f32.mrf.mxu0
    %v829 = vpop.f32.mrf.mxu0
    %v830 = vadd.f32 %v733, %v829
    %v831 = vpop.f32.mrf.mxu0
    %832 = vmatprep.mubr.bf16.mxu0 %v160
    %833 = vmatmul.mubr.bf16.gmra.mxu0 %v159
    %v834 = vpop.f32.mrf.mxu0
    %v835 = vadd.f32 %v738, %v834
    %v836 = vpop.f32.mrf.mxu0
    %v837 = vpop.f32.mrf.mxu0
    %v838 = vadd.f32 %v741, %v837
    %v839 = vpop.f32.mrf.mxu0
    %840 = vmatprep.mubr.bf16.mxu0 %v166
    %841 = vmatmul.mubr.bf16.gmra.mxu0 %v165
    %v842 = vpop.f32.mrf.mxu0
    %v843 = vadd.f32 %v746, %v842
    %v844 = vpop.f32.mrf.mxu0
    %v845 = vpop.f32.mrf.mxu0
    %v846 = vadd.f32 %v749, %v845
    %v847 = vpop.f32.mrf.mxu0
    %848 = vdwg.mxu0
    %v849 = vmax.f32 %v787, 0.0
    %v850 = vmax.f32 %v790, 0.0
    %v851 = vmax.f32 %v795, 0.0
    %v852 = vmax.f32 %v798, 0.0
    %v853 = vmax.f32 %v803, 0.0
    %v854 = vmax.f32 %v806, 0.0
    %v855 = vmax.f32 %v811, 0.0
    %v856 = vmax.f32 %v814, 0.0
    %v857 = vmax.f32 %v819, 0.0
    %v858 = vmax.f32 %v822, 0.0
    %v859 = vmax.f32 %v827, 0.0
    %v860 = vmax.f32 %v830, 0.0
    %v861 = vmax.f32 %v835, 0.0
    %v862 = vmax.f32 %v838, 0.0
    %v863 = vmax.f32 %v843, 0.0
    %v864 = vmax.f32 %v846, 0.0
    %v865 = vld [vmem:[%s3] sm:$0xf]
    %v866 = vpack.c.bf16 %v850, %v849
    %v867 = vpack.c.bf16 %v852, %v851
    %v868 = vpack.c.bf16 %v854, %v853
    %v869 = vpack.c.bf16 %v856, %v855
    %v870 = vpack.c.bf16 %v858, %v857
    %v871 = vpack.c.bf16 %v860, %v859
    %v872 = vpack.c.bf16 %v862, %v861
    %v873 = vpack.c.bf16 %v864, %v863
    %vm874 = vcmask 261120
    %v876 = vsel %vm874, %v865, 0
    %v879 = vsel %vm874, %v866, 0
    %v882 = vsel %vm874, %v867, 0
    %v885 = vsel %vm874, %v868, 0
    %v888 = vsel %vm874, %v869, 0
    %v891 = vsel %vm874, %v870, 0
    %v894 = vsel %vm874, %v871, 0
    %v897 = vsel %vm874, %v872, 0
    %v900 = vsel %vm874, %v873, 0
    %902 = vmatprep.subr.bf16.mxu0 0
    %903 = vmatpush1.bf16.xpose.msra.mxu0 %v900
    %904 = vmatprep.subr.bf16.mxu0 0
    %905 = vmatpush1.bf16.xpose.msra.mxu0 %v897
    %906 = vmatprep.subr.bf16.mxu0 0
    %907 = vmatpush1.bf16.xpose.msra.mxu0 %v894
    %908 = vmatprep.subr.bf16.mxu0 0
    %909 = vmatpush1.bf16.xpose.msra.mxu0 %v891
    %910 = vmatprep.subr.bf16.mxu0 0
    %911 = vmatpush1.bf16.xpose.msra.mxu0 %v888
    %912 = vmatprep.subr.bf16.mxu0 0
    %913 = vmatpush1.bf16.xpose.msra.mxu0 %v885
    %914 = vmatprep.subr.bf16.mxu0 0
    %915 = vmatpush1.bf16.xpose.msra.mxu0 %v882
    %916 = vmatprep.subr.bf16.mxu0 0
    %917 = vmatpush1.bf16.xpose.msra.mxu0 %v879
    %918 = vmatprep.subr.bf16.mxu0 0
    %919 = vmatpush2.bf16.xpose.msra.mxu0 0
    %920 = vmatprep.subr.bf16.mxu0 0
    %921 = vmatpush2.bf16.xpose.msra.mxu0 0
    %922 = vmatprep.subr.bf16.mxu0 0
    %923 = vmatpush2.bf16.xpose.msra.mxu0 0
    %924 = vmatprep.subr.bf16.mxu0 0
    %925 = vmatpush2.bf16.xpose.msra.mxu0 0
    %926 = vmatprep.subr.bf16.mxu0 0
    %927 = vmatpush2.bf16.xpose.msra.mxu0 0
    %928 = vmatprep.subr.bf16.mxu0 0
    %929 = vmatpush2.bf16.xpose.msra.mxu0 0
    %930 = vmatprep.subr.bf16.mxu0 0
    %931 = vmatpush2.bf16.xpose.msra.mxu0 0
    %932 = vmatprep.subr.bf16.mxu0 0
    %933 = vmatpush2.bf16.xpose.msra.mxu0 0
    %934 = vmatprep.mubr.bf16.mxu0 0
    %935 = vmatmul.mubr.bf16.gmra.mxu0 %v876
    %v936 = vpop.f32.mrf.mxu0
    %v937 = vadd.f32 0.0, %v936
    %v938 = vpop.f32.mrf.mxu0
    %v939 = vpop.f32.mrf.mxu0
    %v940 = vpop.f32.mrf.mxu0
    %941 = vdwg.mxu0
    %s942 = sld [smem:[#allocation2]]
    %v943 = vstv %s942
    %v944 = vadd.f32 %v937, %v943
    %v945 = vxor.u32 %v944, 2147483648
    %v946 = vmul.f32 %v945, 1.442695
    %v947 = vpow.pop %v946
    %v948 = vadd.f32 %v947, 1.0
    %v949 = vrcp.pop %v948
    %v950 = vmul.f32 1.0, %v949
    %951 = vst [vmem:[#allocation3] sm:$0x1] %v950
    // Predicated region
    $region22: #{tpu_custom_call.1} parent=1 // pred_check
      _
    $region23: #{tpu_custom_call.1} parent=1 // pred_check_branch
      %953 = sbr.rel (0) target = $region25
    $region24: #{tpu_custom_call.1} parent=1 // pred_region
      %s955 = ssub.s32 16, 16
      %956 = vsyncadd [#allocation4], %s955
      %s958 = sshll.u32 [#allocation3], 4
      %s959 = int_to_ptr.vmem [resolvable:$true] %s958
      %961 = dma.vmem_to_hbm [thread:$0]  %s959, 16, %s5, [#allocation4]
    $region25: #{tpu_custom_call.1} parent=1 // pred_fallthru
      _
    // Predicated region
    $region26: #{tpu_custom_call.1} parent=1 // pred_check
      _
    $region27: #{tpu_custom_call.1} parent=1 // pred_check_branch
      %963 = sbr.rel (0) target = $region29
    $region28: #{tpu_custom_call.1} parent=1 // pred_region
      %964 = dma.done [#allocation4], 16
    $region29: #{tpu_custom_call.1} parent=1 // pred_fallthru
      _
    %965 = vsyncpa [#allocation4], 1

</llo_original>
